<compile_context>
chip_gen: v5e
topology: v5e:2x2
jax: 0.10.0
libtpu: 0.0.40
codegen_flags: <defaults>
</compile_context>

<pallas_src>
import jax
import jax.numpy as jnp
import numpy as np
from jax.experimental import pallas as pl
from jax.experimental.pallas import tpu as pltpu

LEVELS = 3
FILTERS_PER_LEVEL = 6


def _make_pyramid_kernel(levels, channels, rows_per_block, width):
    """Fused pyramid kernel for fixed static sizes.

    Ref shapes seen by the kernel:
      w_ref       : (levels, channels)                       float32, SMEM
      x_ref       : (N, channels, rows_per_block * width)    VMEM (lane-dense)
      out_refs[l] : (N, (rows_per_block//2**l) * (width//2**l))  VMEM
    """

    def kernel(w_ref, x_ref, *out_refs):
        # Per-channel lane-dense views of the resident block, reused by every
        # level (x is DMA'd from HBM exactly once per grid step).
        chans = [x_ref[:, c, :].astype(jnp.float32) for c in range(channels)]

        for level in range(levels):
            # 1x1 conv == per-pixel weighted channel sum: SMEM-scalar * vreg
            # MAC chain on the VPU (kept off the MXU: K = C is tiny).
            s = w_ref[level, 0] * chans[0]
            for c in range(1, channels):
                s = s + w_ref[level, c] * chans[c]          # (N, RB*W) f32

            o_ref = out_refs[level]
            k = 1 << level                                  # decimation factor
            if k == 1:
                o_ref[...] = s.astype(o_ref.dtype)          # dense lane store
                continue

            # In-register decimation by k in both spatial dims (nearest-
            # neighbour 0.5x applied `level` times == keep every k-th row/col).
            # Decimation commutes with the per-pixel conv, so only the
            # single-channel sum is decimated.  Column selection uses an exact
            # one-hot mask + minor-axis reduction (no strided slices needed).
            w_out = width // k
            r_out = rows_per_block // k
            col = jax.lax.broadcasted_iota(jnp.int32, (w_out, width), 1)
            ocol = jax.lax.broadcasted_iota(jnp.int32, (w_out, width), 0)
            sel = col == ocol * k                           # (w_out, W) one-hot
            # TODO(synk): the masked-reduce column select does O(W) VPU work per
            # kept pixel; for very wide images swap in a strided-load path.
            for i in range(r_out):
                start = (k * i) * width                     # source row k*i
                row = s[:, start:start + width]             # (N, W), static slice
                picked = jnp.where(sel[None, :, :], row[:, None, :], 0.0)
                o_ref[:, i * w_out:(i + 1) * w_out] = (
                    jnp.sum(picked, axis=-1).astype(o_ref.dtype))  # (N, w_out)

    return kernel


def _pick_row_block(n, c, h, w, k_max, itemsize, target_bytes=4 << 20):
    """Rows per grid step: whole image if small, else the largest row chunk that
    divides H, keeps every level's flattened block a multiple of 128 lanes and
    fits a byte budget sized for double-buffering inside v7x's 64 MiB VMEM."""
    if n * c * h * w * itemsize <= target_bytes:
        return h
    candidates = [
        rb for rb in range(k_max, h, k_max)
        if h % rb == 0
        and (rb * w) % (128 * k_max * k_max) == 0
        and n * c * rb * w * itemsize <= target_bytes
    ]
    return max(candidates) if candidates else h


def steerable_pyramid_forward(x, filters):
    """x: (N, C, H, W); filters: (levels, C). Returns [(N,1,H/2^l,W/2^l)]."""
    n, c, h, w = x.shape
    levels, c_f = filters.shape
    assert c == c_f, "input channels must equal filters_per_level"
    k_max = 1 << (levels - 1)
    # TODO(synk): odd spatial dims: F.interpolate(0.5,'nearest') floors while
    # ::2 ceils; we require dims divisible by 2**(levels-1) (true here).
    assert h % k_max == 0 and w % k_max == 0

    filters = filters.astype(jnp.float32)     # SMEM scalar path assumes f32
    itemsize = x.dtype.itemsize
    x_flat = x.reshape(n, c, h * w)           # free bitcast -> lane-dense last dim

    rb = _pick_row_block(n, c, h, w, k_max, itemsize)
    grid = (h // rb,)

    out_shape = tuple(
        jax.ShapeDtypeStruct((n, (h // (1 << l)) * (w // (1 << l))), x.dtype)
        for l in range(levels))
    in_specs = [
        # conv weights: whole (levels, C) table in SMEM for scalar reads
        pl.BlockSpec(memory_space=pltpu.MemorySpace.SMEM),
        # whole batch x all channels x a lane-dense chunk of rows per step
        pl.BlockSpec((n, c, rb * w), lambda r: (0, 0, r)),
    ]
    out_specs = tuple(
        pl.BlockSpec((n, (rb // (1 << l)) * (w // (1 << l))), lambda r: (0, r))
        for l in range(levels))

    in_block = n * c * rb * w * itemsize
    out_blocks = sum(n * (rb // (1 << l)) * (w // (1 << l)) * itemsize
                     for l in range(levels))
    # double-buffered input + outputs, with headroom; capped under v7x's 64 MiB
    vmem_limit = int(min(56 << 20, max(32 << 20, 3 * (in_block + out_blocks))))

    flops = 2 * levels * n * c * h * w
    bytes_accessed = (n * c * h * w + int(filters.size)) * itemsize + sum(
        n * (h // (1 << l)) * (w // (1 << l)) * itemsize for l in range(levels))

    outs = pl.pallas_call(
        _make_pyramid_kernel(levels, c, rb, w),
        out_shape=out_shape,
        grid_spec=pl.GridSpec(grid=grid, in_specs=in_specs, out_specs=out_specs),
        compiler_params=pltpu.CompilerParams(
            dimension_semantics=("parallel",),
            vmem_limit_bytes=vmem_limit),
        cost_estimate=pl.CostEstimate(
            flops=flops, transcendentals=0, bytes_accessed=bytes_accessed),
    )(filters, x_flat)

    return [o.reshape(n, 1, h // (1 << l), w // (1 << l))
            for l, o in enumerate(outs)]


def _reference(x, filters):
    pyramid = []
    for level in range(filters.shape[0]):
        wv = filters[level].reshape(1, -1, 1, 1)
        pyramid.append(jnp.sum(x * wv, axis=1, keepdims=True))
        x = x[:, :, ::2, ::2]
    return pyramid


if __name__ == "__main__":
    key = jax.random.PRNGKey(0)
    k_w, k_x = jax.random.split(key)

    # deterministic "parameters" (torch.randn(levels, filters_per_level) analogue)
    filters = jax.random.normal(k_w, (LEVELS, FILTERS_PER_LEVEL), dtype=jnp.float32)
    # input: batch=2, channels=filters_per_level=6, spatial=16x16
    x = jax.random.normal(k_x, (2, FILTERS_PER_LEVEL, 16, 16), dtype=jnp.float32)

    pyramid = steerable_pyramid_forward(x, filters)
    pyramid = [jax.block_until_ready(p) for p in pyramid]

    ref = _reference(x, filters)
    assert len(pyramid) == LEVELS
    for p, r in zip(pyramid, ref):
        assert p.shape == r.shape and p.dtype == r.dtype
        np.testing.assert_allclose(np.asarray(p), np.asarray(r), rtol=1e-5, atol=1e-5)

    print("KERNEL_OK")
</pallas_src>

<mosaic_0001>
module attributes {stable_mosaic.version = 11 : i64} {
  func.func @kernel(%arg0: i32, %arg1: memref<3x6xf32, #tpu.memory_space<smem>>, %arg2: memref<2x6x256xf32, #tpu.memory_space<vmem>>, %arg3: memref<2x256xf32, #tpu.memory_space<vmem>>, %arg4: memref<2x64xf32, #tpu.memory_space<vmem>>, %arg5: memref<2x16xf32, #tpu.memory_space<vmem>>) attributes {dimension_semantics = [#tpu.dimension_semantics<parallel>], iteration_bounds = array<i64: 1>, scalar_prefetch = 0 : i64, scratch_operands = 0 : i64, tpu.core_type = #tpu.core_type<tc>, window_params = [{transform_indices = @transform_0, window_bounds = array<i64: 3, 6>}, {transform_indices = @transform_1, window_bounds = array<i64: 2, 6, 256>}, {transform_indices = @transform_2, window_bounds = array<i64: 2, 256>}, {transform_indices = @transform_3, window_bounds = array<i64: 2, 64>}, {transform_indices = @transform_4, window_bounds = array<i64: 2, 16>}]} {
    %c0 = arith.constant 0 : index
    %c0_0 = arith.constant 0 : index
    %c0_1 = arith.constant 0 : index
    %0 = vector.load %arg2[%c0, %c0_0, %c0_1] : memref<2x6x256xf32, #tpu.memory_space<vmem>>, vector<2x1x256xf32>
    %1 = vector.shape_cast %0 : vector<2x1x256xf32> to vector<2x256xf32>
    %c0_2 = arith.constant 0 : index
    %c1 = arith.constant 1 : index
    %c0_3 = arith.constant 0 : index
    %2 = vector.load %arg2[%c0_2, %c1, %c0_3] : memref<2x6x256xf32, #tpu.memory_space<vmem>>, vector<2x1x256xf32>
    %3 = vector.shape_cast %2 : vector<2x1x256xf32> to vector<2x256xf32>
    %c0_4 = arith.constant 0 : index
    %c2 = arith.constant 2 : index
    %c0_5 = arith.constant 0 : index
    %4 = vector.load %arg2[%c0_4, %c2, %c0_5] : memref<2x6x256xf32, #tpu.memory_space<vmem>>, vector<2x1x256xf32>
    %5 = vector.shape_cast %4 : vector<2x1x256xf32> to vector<2x256xf32>
    %c0_6 = arith.constant 0 : index
    %c3 = arith.constant 3 : index
    %c0_7 = arith.constant 0 : index
    %6 = vector.load %arg2[%c0_6, %c3, %c0_7] : memref<2x6x256xf32, #tpu.memory_space<vmem>>, vector<2x1x256xf32>
    %7 = vector.shape_cast %6 : vector<2x1x256xf32> to vector<2x256xf32>
    %c0_8 = arith.constant 0 : index
    %c4 = arith.constant 4 : index
    %c0_9 = arith.constant 0 : index
    %8 = vector.load %arg2[%c0_8, %c4, %c0_9] : memref<2x6x256xf32, #tpu.memory_space<vmem>>, vector<2x1x256xf32>
    %9 = vector.shape_cast %8 : vector<2x1x256xf32> to vector<2x256xf32>
    %c0_10 = arith.constant 0 : index
    %c5 = arith.constant 5 : index
    %c0_11 = arith.constant 0 : index
    %10 = vector.load %arg2[%c0_10, %c5, %c0_11] : memref<2x6x256xf32, #tpu.memory_space<vmem>>, vector<2x1x256xf32>
    %11 = vector.shape_cast %10 : vector<2x1x256xf32> to vector<2x256xf32>
    %c0_12 = arith.constant 0 : index
    %c0_13 = arith.constant 0 : index
    %12 = memref.load %arg1[%c0_12, %c0_13] : memref<3x6xf32, #tpu.memory_space<smem>>
    %13 = vector.broadcast %12 : f32 to vector<2x256xf32>
    %14 = arith.mulf %13, %1 : vector<2x256xf32>
    %c0_14 = arith.constant 0 : index
    %c1_15 = arith.constant 1 : index
    %15 = memref.load %arg1[%c0_14, %c1_15] : memref<3x6xf32, #tpu.memory_space<smem>>
    %16 = vector.broadcast %15 : f32 to vector<2x256xf32>
    %17 = arith.mulf %16, %3 : vector<2x256xf32>
    %18 = arith.addf %14, %17 : vector<2x256xf32>
    %c0_16 = arith.constant 0 : index
    %c2_17 = arith.constant 2 : index
    %19 = memref.load %arg1[%c0_16, %c2_17] : memref<3x6xf32, #tpu.memory_space<smem>>
    %20 = vector.broadcast %19 : f32 to vector<2x256xf32>
    %21 = arith.mulf %20, %5 : vector<2x256xf32>
    %22 = arith.addf %18, %21 : vector<2x256xf32>
    %c0_18 = arith.constant 0 : index
    %c3_19 = arith.constant 3 : index
    %23 = memref.load %arg1[%c0_18, %c3_19] : memref<3x6xf32, #tpu.memory_space<smem>>
    %24 = vector.broadcast %23 : f32 to vector<2x256xf32>
    %25 = arith.mulf %24, %7 : vector<2x256xf32>
    %26 = arith.addf %22, %25 : vector<2x256xf32>
    %c0_20 = arith.constant 0 : index
    %c4_21 = arith.constant 4 : index
    %27 = memref.load %arg1[%c0_20, %c4_21] : memref<3x6xf32, #tpu.memory_space<smem>>
    %28 = vector.broadcast %27 : f32 to vector<2x256xf32>
    %29 = arith.mulf %28, %9 : vector<2x256xf32>
    %30 = arith.addf %26, %29 : vector<2x256xf32>
    %c0_22 = arith.constant 0 : index
    %c5_23 = arith.constant 5 : index
    %31 = memref.load %arg1[%c0_22, %c5_23] : memref<3x6xf32, #tpu.memory_space<smem>>
    %32 = vector.broadcast %31 : f32 to vector<2x256xf32>
    %33 = arith.mulf %32, %11 : vector<2x256xf32>
    %34 = arith.addf %30, %33 : vector<2x256xf32>
    %c0_24 = arith.constant 0 : index
    %c0_25 = arith.constant 0 : index
    %35 = vector.load %arg3[%c0_24, %c0_25] : memref<2x256xf32, #tpu.memory_space<vmem>>, vector<2x256xf32>
    tpu.vector_store %arg3[%c0_24, %c0_25], %34 {strides = array<i32>} : memref<2x256xf32, #tpu.memory_space<vmem>>, vector<2x256xf32>,
    %c1_26 = arith.constant 1 : index
    %c0_27 = arith.constant 0 : index
    %36 = memref.load %arg1[%c1_26, %c0_27] : memref<3x6xf32, #tpu.memory_space<smem>>
    %37 = vector.broadcast %36 : f32 to vector<2x256xf32>
    %38 = arith.mulf %37, %1 : vector<2x256xf32>
    %c1_28 = arith.constant 1 : index
    %c1_29 = arith.constant 1 : index
    %39 = memref.load %arg1[%c1_28, %c1_29] : memref<3x6xf32, #tpu.memory_space<smem>>
    %40 = vector.broadcast %39 : f32 to vector<2x256xf32>
    %41 = arith.mulf %40, %3 : vector<2x256xf32>
    %42 = arith.addf %38, %41 : vector<2x256xf32>
    %c1_30 = arith.constant 1 : index
    %c2_31 = arith.constant 2 : index
    %43 = memref.load %arg1[%c1_30, %c2_31] : memref<3x6xf32, #tpu.memory_space<smem>>
    %44 = vector.broadcast %43 : f32 to vector<2x256xf32>
    %45 = arith.mulf %44, %5 : vector<2x256xf32>
    %46 = arith.addf %42, %45 : vector<2x256xf32>
    %c1_32 = arith.constant 1 : index
    %c3_33 = arith.constant 3 : index
    %47 = memref.load %arg1[%c1_32, %c3_33] : memref<3x6xf32, #tpu.memory_space<smem>>
    %48 = vector.broadcast %47 : f32 to vector<2x256xf32>
    %49 = arith.mulf %48, %7 : vector<2x256xf32>
    %50 = arith.addf %46, %49 : vector<2x256xf32>
    %c1_34 = arith.constant 1 : index
    %c4_35 = arith.constant 4 : index
    %51 = memref.load %arg1[%c1_34, %c4_35] : memref<3x6xf32, #tpu.memory_space<smem>>
    %52 = vector.broadcast %51 : f32 to vector<2x256xf32>
    %53 = arith.mulf %52, %9 : vector<2x256xf32>
    %54 = arith.addf %50, %53 : vector<2x256xf32>
    %c1_36 = arith.constant 1 : index
    %c5_37 = arith.constant 5 : index
    %55 = memref.load %arg1[%c1_36, %c5_37] : memref<3x6xf32, #tpu.memory_space<smem>>
    %56 = vector.broadcast %55 : f32 to vector<2x256xf32>
    %57 = arith.mulf %56, %11 : vector<2x256xf32>
    %58 = arith.addf %54, %57 : vector<2x256xf32>
    %59 = tpu.iota {dimensions = array<i32: 1>} : vector<8x16xi32>
    %60 = tpu.iota {dimensions = array<i32: 0>} : vector<8x16xi32>
    %c2_i32 = arith.constant 2 : i32
    %61 = vector.broadcast %c2_i32 : i32 to vector<8x16xi32>
    %62 = arith.muli %60, %61 : vector<8x16xi32>
    %63 = arith.cmpi eq, %59, %62 : vector<8x16xi32>
    %64 = vector.extract_strided_slice %58 {offsets = [0, 0], sizes = [2, 16], strides = [1, 1]} : vector<2x256xf32> to vector<2x16xf32>
    %65 = vector.shape_cast %63 : vector<8x16xi1> to vector<1x8x16xi1>
    %66 = vector.shape_cast %64 : vector<2x16xf32> to vector<2x1x16xf32>
    %cst = arith.constant 0.000000e+00 : f32
    %67 = vector.shape_cast %65 : vector<1x8x16xi1> to vector<1x8x16xi1>
    %68 = vector.broadcast %67 : vector<1x8x16xi1> to vector<2x8x16xi1>
    %69 = vector.shape_cast %66 : vector<2x1x16xf32> to vector<2x1x16xf32>
    %70 = vector.broadcast %69 : vector<2x1x16xf32> to vector<2x8x16xf32>
    %71 = vector.broadcast %cst : f32 to vector<2x8x16xf32>
    %72 = arith.select %68, %70, %71 : vector<2x8x16xi1>, vector<2x8x16xf32>
    %cst_38 = arith.constant dense<0.000000e+00> : vector<2x8xf32>
    %73 = vector.multi_reduction <add>, %72, %cst_38 [2] : vector<2x8x16xf32> to vector<2x8xf32>
    %c0_39 = arith.constant 0 : index
    %c0_40 = arith.constant 0 : index
    %74 = vector.load %arg4[%c0_39, %c0_40] : memref<2x64xf32, #tpu.memory_space<vmem>>, vector<2x8xf32>
    tpu.vector_store %arg4[%c0_39, %c0_40], %73 {strides = array<i32>} : memref<2x64xf32, #tpu.memory_space<vmem>>, vector<2x8xf32>,
    %75 = vector.extract_strided_slice %58 {offsets = [0, 32], sizes = [2, 16], strides = [1, 1]} : vector<2x256xf32> to vector<2x16xf32>
    %76 = vector.shape_cast %63 : vector<8x16xi1> to vector<1x8x16xi1>
    %77 = vector.shape_cast %75 : vector<2x16xf32> to vector<2x1x16xf32>
    %cst_41 = arith.constant 0.000000e+00 : f32
    %78 = vector.shape_cast %76 : vector<1x8x16xi1> to vector<1x8x16xi1>
    %79 = vector.broadcast %78 : vector<1x8x16xi1> to vector<2x8x16xi1>
    %80 = vector.shape_cast %77 : vector<2x1x16xf32> to vector<2x1x16xf32>
    %81 = vector.broadcast %80 : vector<2x1x16xf32> to vector<2x8x16xf32>
    %82 = vector.broadcast %cst_41 : f32 to vector<2x8x16xf32>
    %83 = arith.select %79, %81, %82 : vector<2x8x16xi1>, vector<2x8x16xf32>
    %cst_42 = arith.constant dense<0.000000e+00> : vector<2x8xf32>
    %84 = vector.multi_reduction <add>, %83, %cst_42 [2] : vector<2x8x16xf32> to vector<2x8xf32>
    %c0_43 = arith.constant 0 : index
    %c8 = arith.constant 8 : index
    %85 = vector.load %arg4[%c0_43, %c8] : memref<2x64xf32, #tpu.memory_space<vmem>>, vector<2x8xf32>
    tpu.vector_store %arg4[%c0_43, %c8], %84 {strides = array<i32>} : memref<2x64xf32, #tpu.memory_space<vmem>>, vector<2x8xf32>,
    %86 = vector.extract_strided_slice %58 {offsets = [0, 64], sizes = [2, 16], strides = [1, 1]} : vector<2x256xf32> to vector<2x16xf32>
    %87 = vector.shape_cast %63 : vector<8x16xi1> to vector<1x8x16xi1>
    %88 = vector.shape_cast %86 : vector<2x16xf32> to vector<2x1x16xf32>
    %cst_44 = arith.constant 0.000000e+00 : f32
    %89 = vector.shape_cast %87 : vector<1x8x16xi1> to vector<1x8x16xi1>
    %90 = vector.broadcast %89 : vector<1x8x16xi1> to vector<2x8x16xi1>
    %91 = vector.shape_cast %88 : vector<2x1x16xf32> to vector<2x1x16xf32>
    %92 = vector.broadcast %91 : vector<2x1x16xf32> to vector<2x8x16xf32>
    %93 = vector.broadcast %cst_44 : f32 to vector<2x8x16xf32>
    %94 = arith.select %90, %92, %93 : vector<2x8x16xi1>, vector<2x8x16xf32>
    %cst_45 = arith.constant dense<0.000000e+00> : vector<2x8xf32>
    %95 = vector.multi_reduction <add>, %94, %cst_45 [2] : vector<2x8x16xf32> to vector<2x8xf32>
    %c0_46 = arith.constant 0 : index
    %c16 = arith.constant 16 : index
    %96 = vector.load %arg4[%c0_46, %c16] : memref<2x64xf32, #tpu.memory_space<vmem>>, vector<2x8xf32>
    tpu.vector_store %arg4[%c0_46, %c16], %95 {strides = array<i32>} : memref<2x64xf32, #tpu.memory_space<vmem>>, vector<2x8xf32>,
    %97 = vector.extract_strided_slice %58 {offsets = [0, 96], sizes = [2, 16], strides = [1, 1]} : vector<2x256xf32> to vector<2x16xf32>
    %98 = vector.shape_cast %63 : vector<8x16xi1> to vector<1x8x16xi1>
    %99 = vector.shape_cast %97 : vector<2x16xf32> to vector<2x1x16xf32>
    %cst_47 = arith.constant 0.000000e+00 : f32
    %100 = vector.shape_cast %98 : vector<1x8x16xi1> to vector<1x8x16xi1>
    %101 = vector.broadcast %100 : vector<1x8x16xi1> to vector<2x8x16xi1>
    %102 = vector.shape_cast %99 : vector<2x1x16xf32> to vector<2x1x16xf32>
    %103 = vector.broadcast %102 : vector<2x1x16xf32> to vector<2x8x16xf32>
    %104 = vector.broadcast %cst_47 : f32 to vector<2x8x16xf32>
    %105 = arith.select %101, %103, %104 : vector<2x8x16xi1>, vector<2x8x16xf32>
    %cst_48 = arith.constant dense<0.000000e+00> : vector<2x8xf32>
    %106 = vector.multi_reduction <add>, %105, %cst_48 [2] : vector<2x8x16xf32> to vector<2x8xf32>
    %c0_49 = arith.constant 0 : index
    %c24 = arith.constant 24 : index
    %107 = vector.load %arg4[%c0_49, %c24] : memref<2x64xf32, #tpu.memory_space<vmem>>, vector<2x8xf32>
    tpu.vector_store %arg4[%c0_49, %c24], %106 {strides = array<i32>} : memref<2x64xf32, #tpu.memory_space<vmem>>, vector<2x8xf32>,
    %108 = vector.extract_strided_slice %58 {offsets = [0, 128], sizes = [2, 16], strides = [1, 1]} : vector<2x256xf32> to vector<2x16xf32>
    %109 = vector.shape_cast %63 : vector<8x16xi1> to vector<1x8x16xi1>
    %110 = vector.shape_cast %108 : vector<2x16xf32> to vector<2x1x16xf32>
    %cst_50 = arith.constant 0.000000e+00 : f32
    %111 = vector.shape_cast %109 : vector<1x8x16xi1> to vector<1x8x16xi1>
    %112 = vector.broadcast %111 : vector<1x8x16xi1> to vector<2x8x16xi1>
    %113 = vector.shape_cast %110 : vector<2x1x16xf32> to vector<2x1x16xf32>
    %114 = vector.broadcast %113 : vector<2x1x16xf32> to vector<2x8x16xf32>
    %115 = vector.broadcast %cst_50 : f32 to vector<2x8x16xf32>
    %116 = arith.select %112, %114, %115 : vector<2x8x16xi1>, vector<2x8x16xf32>
    %cst_51 = arith.constant dense<0.000000e+00> : vector<2x8xf32>
    %117 = vector.multi_reduction <add>, %116, %cst_51 [2] : vector<2x8x16xf32> to vector<2x8xf32>
    %c0_52 = arith.constant 0 : index
    %c32 = arith.constant 32 : index
    %118 = vector.load %arg4[%c0_52, %c32] : memref<2x64xf32, #tpu.memory_space<vmem>>, vector<2x8xf32>
    tpu.vector_store %arg4[%c0_52, %c32], %117 {strides = array<i32>} : memref<2x64xf32, #tpu.memory_space<vmem>>, vector<2x8xf32>,
    %119 = vector.extract_strided_slice %58 {offsets = [0, 160], sizes = [2, 16], strides = [1, 1]} : vector<2x256xf32> to vector<2x16xf32>
    %120 = vector.shape_cast %63 : vector<8x16xi1> to vector<1x8x16xi1>
    %121 = vector.shape_cast %119 : vector<2x16xf32> to vector<2x1x16xf32>
    %cst_53 = arith.constant 0.000000e+00 : f32
    %122 = vector.shape_cast %120 : vector<1x8x16xi1> to vector<1x8x16xi1>
    %123 = vector.broadcast %122 : vector<1x8x16xi1> to vector<2x8x16xi1>
    %124 = vector.shape_cast %121 : vector<2x1x16xf32> to vector<2x1x16xf32>
    %125 = vector.broadcast %124 : vector<2x1x16xf32> to vector<2x8x16xf32>
    %126 = vector.broadcast %cst_53 : f32 to vector<2x8x16xf32>
    %127 = arith.select %123, %125, %126 : vector<2x8x16xi1>, vector<2x8x16xf32>
    %cst_54 = arith.constant dense<0.000000e+00> : vector<2x8xf32>
    %128 = vector.multi_reduction <add>, %127, %cst_54 [2] : vector<2x8x16xf32> to vector<2x8xf32>
    %c0_55 = arith.constant 0 : index
    %c40 = arith.constant 40 : index
    %129 = vector.load %arg4[%c0_55, %c40] : memref<2x64xf32, #tpu.memory_space<vmem>>, vector<2x8xf32>
    tpu.vector_store %arg4[%c0_55, %c40], %128 {strides = array<i32>} : memref<2x64xf32, #tpu.memory_space<vmem>>, vector<2x8xf32>,
    %130 = vector.extract_strided_slice %58 {offsets = [0, 192], sizes = [2, 16], strides = [1, 1]} : vector<2x256xf32> to vector<2x16xf32>
    %131 = vector.shape_cast %63 : vector<8x16xi1> to vector<1x8x16xi1>
    %132 = vector.shape_cast %130 : vector<2x16xf32> to vector<2x1x16xf32>
    %cst_56 = arith.constant 0.000000e+00 : f32
    %133 = vector.shape_cast %131 : vector<1x8x16xi1> to vector<1x8x16xi1>
    %134 = vector.broadcast %133 : vector<1x8x16xi1> to vector<2x8x16xi1>
    %135 = vector.shape_cast %132 : vector<2x1x16xf32> to vector<2x1x16xf32>
    %136 = vector.broadcast %135 : vector<2x1x16xf32> to vector<2x8x16xf32>
    %137 = vector.broadcast %cst_56 : f32 to vector<2x8x16xf32>
    %138 = arith.select %134, %136, %137 : vector<2x8x16xi1>, vector<2x8x16xf32>
    %cst_57 = arith.constant dense<0.000000e+00> : vector<2x8xf32>
    %139 = vector.multi_reduction <add>, %138, %cst_57 [2] : vector<2x8x16xf32> to vector<2x8xf32>
    %c0_58 = arith.constant 0 : index
    %c48 = arith.constant 48 : index
    %140 = vector.load %arg4[%c0_58, %c48] : memref<2x64xf32, #tpu.memory_space<vmem>>, vector<2x8xf32>
    tpu.vector_store %arg4[%c0_58, %c48], %139 {strides = array<i32>} : memref<2x64xf32, #tpu.memory_space<vmem>>, vector<2x8xf32>,
    %141 = vector.extract_strided_slice %58 {offsets = [0, 224], sizes = [2, 16], strides = [1, 1]} : vector<2x256xf32> to vector<2x16xf32>
    %142 = vector.shape_cast %63 : vector<8x16xi1> to vector<1x8x16xi1>
    %143 = vector.shape_cast %141 : vector<2x16xf32> to vector<2x1x16xf32>
    %cst_59 = arith.constant 0.000000e+00 : f32
    %144 = vector.shape_cast %142 : vector<1x8x16xi1> to vector<1x8x16xi1>
    %145 = vector.broadcast %144 : vector<1x8x16xi1> to vector<2x8x16xi1>
    %146 = vector.shape_cast %143 : vector<2x1x16xf32> to vector<2x1x16xf32>
    %147 = vector.broadcast %146 : vector<2x1x16xf32> to vector<2x8x16xf32>
    %148 = vector.broadcast %cst_59 : f32 to vector<2x8x16xf32>
    %149 = arith.select %145, %147, %148 : vector<2x8x16xi1>, vector<2x8x16xf32>
    %cst_60 = arith.constant dense<0.000000e+00> : vector<2x8xf32>
    %150 = vector.multi_reduction <add>, %149, %cst_60 [2] : vector<2x8x16xf32> to vector<2x8xf32>
    %c0_61 = arith.constant 0 : index
    %c56 = arith.constant 56 : index
    %151 = vector.load %arg4[%c0_61, %c56] : memref<2x64xf32, #tpu.memory_space<vmem>>, vector<2x8xf32>
    tpu.vector_store %arg4[%c0_61, %c56], %150 {strides = array<i32>} : memref<2x64xf32, #tpu.memory_space<vmem>>, vector<2x8xf32>,
    %c2_62 = arith.constant 2 : index
    %c0_63 = arith.constant 0 : index
    %152 = memref.load %arg1[%c2_62, %c0_63] : memref<3x6xf32, #tpu.memory_space<smem>>
    %153 = vector.broadcast %152 : f32 to vector<2x256xf32>
    %154 = arith.mulf %153, %1 : vector<2x256xf32>
    %c2_64 = arith.constant 2 : index
    %c1_65 = arith.constant 1 : index
    %155 = memref.load %arg1[%c2_64, %c1_65] : memref<3x6xf32, #tpu.memory_space<smem>>
    %156 = vector.broadcast %155 : f32 to vector<2x256xf32>
    %157 = arith.mulf %156, %3 : vector<2x256xf32>
    %158 = arith.addf %154, %157 : vector<2x256xf32>
    %c2_66 = arith.constant 2 : index
    %c2_67 = arith.constant 2 : index
    %159 = memref.load %arg1[%c2_66, %c2_67] : memref<3x6xf32, #tpu.memory_space<smem>>
    %160 = vector.broadcast %159 : f32 to vector<2x256xf32>
    %161 = arith.mulf %160, %5 : vector<2x256xf32>
    %162 = arith.addf %158, %161 : vector<2x256xf32>
    %c2_68 = arith.constant 2 : index
    %c3_69 = arith.constant 3 : index
    %163 = memref.load %arg1[%c2_68, %c3_69] : memref<3x6xf32, #tpu.memory_space<smem>>
    %164 = vector.broadcast %163 : f32 to vector<2x256xf32>
    %165 = arith.mulf %164, %7 : vector<2x256xf32>
    %166 = arith.addf %162, %165 : vector<2x256xf32>
    %c2_70 = arith.constant 2 : index
    %c4_71 = arith.constant 4 : index
    %167 = memref.load %arg1[%c2_70, %c4_71] : memref<3x6xf32, #tpu.memory_space<smem>>
    %168 = vector.broadcast %167 : f32 to vector<2x256xf32>
    %169 = arith.mulf %168, %9 : vector<2x256xf32>
    %170 = arith.addf %166, %169 : vector<2x256xf32>
    %c2_72 = arith.constant 2 : index
    %c5_73 = arith.constant 5 : index
    %171 = memref.load %arg1[%c2_72, %c5_73] : memref<3x6xf32, #tpu.memory_space<smem>>
    %172 = vector.broadcast %171 : f32 to vector<2x256xf32>
    %173 = arith.mulf %172, %11 : vector<2x256xf32>
    %174 = arith.addf %170, %173 : vector<2x256xf32>
    %175 = tpu.iota {dimensions = array<i32: 1>} : vector<4x16xi32>
    %176 = tpu.iota {dimensions = array<i32: 0>} : vector<4x16xi32>
    %c4_i32 = arith.constant 4 : i32
    %177 = vector.broadcast %c4_i32 : i32 to vector<4x16xi32>
    %178 = arith.muli %176, %177 : vector<4x16xi32>
    %179 = arith.cmpi eq, %175, %178 : vector<4x16xi32>
    %180 = vector.extract_strided_slice %174 {offsets = [0, 0], sizes = [2, 16], strides = [1, 1]} : vector<2x256xf32> to vector<2x16xf32>
    %181 = vector.shape_cast %179 : vector<4x16xi1> to vector<1x4x16xi1>
    %182 = vector.shape_cast %180 : vector<2x16xf32> to vector<2x1x16xf32>
    %cst_74 = arith.constant 0.000000e+00 : f32
    %183 = vector.shape_cast %181 : vector<1x4x16xi1> to vector<1x4x16xi1>
    %184 = vector.broadcast %183 : vector<1x4x16xi1> to vector<2x4x16xi1>
    %185 = vector.shape_cast %182 : vector<2x1x16xf32> to vector<2x1x16xf32>
    %186 = vector.broadcast %185 : vector<2x1x16xf32> to vector<2x4x16xf32>
    %187 = vector.broadcast %cst_74 : f32 to vector<2x4x16xf32>
    %188 = arith.select %184, %186, %187 : vector<2x4x16xi1>, vector<2x4x16xf32>
    %cst_75 = arith.constant dense<0.000000e+00> : vector<2x4xf32>
    %189 = vector.multi_reduction <add>, %188, %cst_75 [2] : vector<2x4x16xf32> to vector<2x4xf32>
    %c0_76 = arith.constant 0 : index
    %c0_77 = arith.constant 0 : index
    %190 = vector.load %arg5[%c0_76, %c0_77] : memref<2x16xf32, #tpu.memory_space<vmem>>, vector<2x4xf32>
    tpu.vector_store %arg5[%c0_76, %c0_77], %189 {strides = array<i32>} : memref<2x16xf32, #tpu.memory_space<vmem>>, vector<2x4xf32>,
    %191 = vector.extract_strided_slice %174 {offsets = [0, 64], sizes = [2, 16], strides = [1, 1]} : vector<2x256xf32> to vector<2x16xf32>
    %192 = vector.shape_cast %179 : vector<4x16xi1> to vector<1x4x16xi1>
    %193 = vector.shape_cast %191 : vector<2x16xf32> to vector<2x1x16xf32>
    %cst_78 = arith.constant 0.000000e+00 : f32
    %194 = vector.shape_cast %192 : vector<1x4x16xi1> to vector<1x4x16xi1>
    %195 = vector.broadcast %194 : vector<1x4x16xi1> to vector<2x4x16xi1>
    %196 = vector.shape_cast %193 : vector<2x1x16xf32> to vector<2x1x16xf32>
    %197 = vector.broadcast %196 : vector<2x1x16xf32> to vector<2x4x16xf32>
    %198 = vector.broadcast %cst_78 : f32 to vector<2x4x16xf32>
    %199 = arith.select %195, %197, %198 : vector<2x4x16xi1>, vector<2x4x16xf32>
    %cst_79 = arith.constant dense<0.000000e+00> : vector<2x4xf32>
    %200 = vector.multi_reduction <add>, %199, %cst_79 [2] : vector<2x4x16xf32> to vector<2x4xf32>
    %c0_80 = arith.constant 0 : index
    %c4_81 = arith.constant 4 : index
    %201 = vector.load %arg5[%c0_80, %c4_81] : memref<2x16xf32, #tpu.memory_space<vmem>>, vector<2x4xf32>
    tpu.vector_store %arg5[%c0_80, %c4_81], %200 {strides = array<i32>} : memref<2x16xf32, #tpu.memory_space<vmem>>, vector<2x4xf32>,
    %202 = vector.extract_strided_slice %174 {offsets = [0, 128], sizes = [2, 16], strides = [1, 1]} : vector<2x256xf32> to vector<2x16xf32>
    %203 = vector.shape_cast %179 : vector<4x16xi1> to vector<1x4x16xi1>
    %204 = vector.shape_cast %202 : vector<2x16xf32> to vector<2x1x16xf32>
    %cst_82 = arith.constant 0.000000e+00 : f32
    %205 = vector.shape_cast %203 : vector<1x4x16xi1> to vector<1x4x16xi1>
    %206 = vector.broadcast %205 : vector<1x4x16xi1> to vector<2x4x16xi1>
    %207 = vector.shape_cast %204 : vector<2x1x16xf32> to vector<2x1x16xf32>
    %208 = vector.broadcast %207 : vector<2x1x16xf32> to vector<2x4x16xf32>
    %209 = vector.broadcast %cst_82 : f32 to vector<2x4x16xf32>
    %210 = arith.select %206, %208, %209 : vector<2x4x16xi1>, vector<2x4x16xf32>
    %cst_83 = arith.constant dense<0.000000e+00> : vector<2x4xf32>
    %211 = vector.multi_reduction <add>, %210, %cst_83 [2] : vector<2x4x16xf32> to vector<2x4xf32>
    %c0_84 = arith.constant 0 : index
    %c8_85 = arith.constant 8 : index
    %212 = vector.load %arg5[%c0_84, %c8_85] : memref<2x16xf32, #tpu.memory_space<vmem>>, vector<2x4xf32>
    tpu.vector_store %arg5[%c0_84, %c8_85], %211 {strides = array<i32>} : memref<2x16xf32, #tpu.memory_space<vmem>>, vector<2x4xf32>,
    %213 = vector.extract_strided_slice %174 {offsets = [0, 192], sizes = [2, 16], strides = [1, 1]} : vector<2x256xf32> to vector<2x16xf32>
    %214 = vector.shape_cast %179 : vector<4x16xi1> to vector<1x4x16xi1>
    %215 = vector.shape_cast %213 : vector<2x16xf32> to vector<2x1x16xf32>
    %cst_86 = arith.constant 0.000000e+00 : f32
    %216 = vector.shape_cast %214 : vector<1x4x16xi1> to vector<1x4x16xi1>
    %217 = vector.broadcast %216 : vector<1x4x16xi1> to vector<2x4x16xi1>
    %218 = vector.shape_cast %215 : vector<2x1x16xf32> to vector<2x1x16xf32>
    %219 = vector.broadcast %218 : vector<2x1x16xf32> to vector<2x4x16xf32>
    %220 = vector.broadcast %cst_86 : f32 to vector<2x4x16xf32>
    %221 = arith.select %217, %219, %220 : vector<2x4x16xi1>, vector<2x4x16xf32>
    %cst_87 = arith.constant dense<0.000000e+00> : vector<2x4xf32>
    %222 = vector.multi_reduction <add>, %221, %cst_87 [2] : vector<2x4x16xf32> to vector<2x4xf32>
    %c0_88 = arith.constant 0 : index
    %c12 = arith.constant 12 : index
    %223 = vector.load %arg5[%c0_88, %c12] : memref<2x16xf32, #tpu.memory_space<vmem>>, vector<2x4xf32>
    tpu.vector_store %arg5[%c0_88, %c12], %222 {strides = array<i32>} : memref<2x16xf32, #tpu.memory_space<vmem>>, vector<2x4xf32>,
    return
  }
  func.func @transform_0(%arg0: i32) -> (i32, i32) {
    %c0_i32 = arith.constant 0 : i32
    %c0_i32_0 = arith.constant 0 : i32
    %c0_i32_1 = arith.constant 0 : i32
    return %c0_i32, %c0_i32_0 : i32, i32
  }
  func.func @transform_1(%arg0: i32) -> (i32, i32, i32) {
    %c0_i32 = arith.constant 0 : i32
    %c0_i32_0 = arith.constant 0 : i32
    %c0_i32_1 = arith.constant 0 : i32
    return %c0_i32, %c0_i32_0, %arg0 : i32, i32, i32
  }
  func.func @transform_2(%arg0: i32) -> (i32, i32) {
    %c0_i32 = arith.constant 0 : i32
    %c0_i32_0 = arith.constant 0 : i32
    return %c0_i32, %arg0 : i32, i32
  }
  func.func @transform_3(%arg0: i32) -> (i32, i32) {
    %c0_i32 = arith.constant 0 : i32
    %c0_i32_0 = arith.constant 0 : i32
    return %c0_i32, %arg0 : i32, i32
  }
  func.func @transform_4(%arg0: i32) -> (i32, i32) {
    %c0_i32 = arith.constant 0 : i32
    %c0_i32_0 = arith.constant 0 : i32
    return %c0_i32, %arg0 : i32, i32
  }
}

</mosaic_0001>

<llo_original>
// kernel: tpu_custom_call.1
$region0: #{tpu_custom_call.1}
  #allocation0 [shape = 'u32[]', space=smem, size = 0x4, offset = 0x4, fixed_abs, tag = 'smem constant byte address 0x4 - core index']
  #allocation1 [shape = 'u32[72,128]{1,0:T(1,128)}', space=vmem, size = 0x9000, scoped, tag = 'internal scratch']
  %s0 = inlined_call_operand.vmem [shape: f32[3,6], index: 0, kind: input, shape index: {}]
  %s1 = inlined_call_operand.vmem [shape: f32[2,6,256], index: 1, kind: input, shape index: {}]
  %s2 = inlined_call_operand.hbm [shape: f32[2,256], index: 2, kind: output, shape index: {0}]
  %s3 = inlined_call_operand.hbm [shape: f32[2,64], index: 3, kind: output, shape index: {1}]
  %s4 = inlined_call_operand.hbm [shape: f32[2,16], index: 4, kind: output, shape index: {2}]
  %5 = xla_tuple %s2, %s3, %s4
  %s6 = sld [smem:[#allocation0]]
  $region38: #{tpu_custom_call.1} parent=0
    _
  %s8 = ssub.s32 1, %s6
  %s9 = scalar_select 0, %s8, %s6
  $region1: #{tpu_custom_call.1} parent=0
    #allocation2 [shape = 'u8[2048]{0}', space=smem, size = 0x800, scoped, tag = 'input window, operand 0, single buffered']
    #allocation3 [shape = 's32[1]{0}', space=sflag, size = 0x4, scoped, tag = 'scoped memory for tpu_custom_call.1']
    #allocation4 [shape = 's32[1]{0}', space=sflag, size = 0x4, scoped, tag = 'scoped memory for tpu_custom_call.1']
    #allocation5 [shape = 'u8[2048]{0}', space=vmem, size = 0x800, scoped, tag = 'output window, operand 0, single buffered']
    #allocation6 [shape = 'u8[1024]{0}', space=vmem, size = 0x400, scoped, tag = 'output window, operand 1, single buffered']
    #allocation7 [shape = 's32[1]{0}', space=sflag, size = 0x4, scoped, tag = 'scoped memory for tpu_custom_call.1']
    #allocation8 [shape = 'u8[1024]{0}', space=vmem, size = 0x400, scoped, tag = 'output window, operand 2, single buffered']
    %10 = vsyncpa [#allocation4], 0
    %11 = vsyncpa [#allocation3], 0
    %12 = vsyncpa [#allocation7], 0
    // Predicated region
    $region2: #{tpu_custom_call.1} parent=1 // pred_check
      _
    $region3: #{tpu_custom_call.1} parent=1 // pred_check_branch
      %14 = sbr.rel (0) target = $region5
    $region4: #{tpu_custom_call.1} parent=1 // pred_region
      %16 = vsyncadd [#allocation4], 0
      %s18 = sshll.u32 %s0, 4
      %s19 = int_to_ptr.vmem [resolvable:$true] %s18
      %21 = dma.vmem_to_smem %s19, 64, [#allocation2], [#allocation4]
    $region5: #{tpu_custom_call.1} parent=1 // pred_fallthru
      _
    // Predicated region
    $region6: #{tpu_custom_call.1} parent=1 // pred_check
      _
    $region7: #{tpu_custom_call.1} parent=1 // pred_check_branch
      %23 = sbr.rel (0) target = $region9
    $region8: #{tpu_custom_call.1} parent=1 // pred_region
      _
    $region9: #{tpu_custom_call.1} parent=1 // pred_fallthru
      _
    // Predicated region
    $region10: #{tpu_custom_call.1} parent=1 // pred_check
      _
    $region11: #{tpu_custom_call.1} parent=1 // pred_check_branch
      %25 = sbr.rel (0) target = $region13
    $region12: #{tpu_custom_call.1} parent=1 // pred_region
      %27 = dma.done [#allocation4], 64
    $region13: #{tpu_custom_call.1} parent=1 // pred_fallthru
      _
    %28 = sfence
    %v29 = vld [vmem:[%s1] ss:$8 sm:$0x3]
    %s30 = scalar_lea.vmem %s1, 16
    %v31 = vld [vmem:[%s30] ss:$8 sm:$0x3]
    %s32 = scalar_lea.vmem %s1, 1
    %v33 = vld [vmem:[%s32] ss:$8 sm:$0x3]
    %s34 = scalar_lea.vmem %s1, 17
    %v35 = vld [vmem:[%s34] ss:$8 sm:$0x3]
    %s36 = scalar_lea.vmem %s1, 2
    %v37 = vld [vmem:[%s36] ss:$8 sm:$0x3]
    %s38 = scalar_lea.vmem %s1, 18
    %v39 = vld [vmem:[%s38] ss:$8 sm:$0x3]
    %s40 = scalar_lea.vmem %s1, 3
    %v41 = vld [vmem:[%s40] ss:$8 sm:$0x3]
    %s42 = scalar_lea.vmem %s1, 19
    %v43 = vld [vmem:[%s42] ss:$8 sm:$0x3]
    %s44 = scalar_lea.vmem %s1, 4
    %v45 = vld [vmem:[%s44] ss:$8 sm:$0x3]
    %s46 = scalar_lea.vmem %s1, 20
    %v47 = vld [vmem:[%s46] ss:$8 sm:$0x3]
    %s48 = scalar_lea.vmem %s1, 5
    %v49 = vld [vmem:[%s48] ss:$8 sm:$0x3]
    %s50 = scalar_lea.vmem %s1, 21
    %v51 = vld [vmem:[%s50] ss:$8 sm:$0x3]
    %s52 = sld [smem:[#allocation2]]
    %v53 = vstv %s52
    %v54 = vmul.f32 %v53, %v29
    %v55 = vmul.f32 %v53, %v31
    %s56 = sld [smem:[#allocation2 + $0x1]]
    %v57 = vstv %s56
    %v58 = vmul.f32 %v57, %v33
    %v59 = vmul.f32 %v57, %v35
    %v60 = vadd.f32 %v54, %v58
    %v61 = vadd.f32 %v55, %v59
    %s62 = sld [smem:[#allocation2 + $0x2]]
    %v63 = vstv %s62
    %v64 = vmul.f32 %v63, %v37
    %v65 = vmul.f32 %v63, %v39
    %v66 = vadd.f32 %v60, %v64
    %v67 = vadd.f32 %v61, %v65
    %s68 = sld [smem:[#allocation2 + $0x3]]
    %v69 = vstv %s68
    %v70 = vmul.f32 %v69, %v41
    %v71 = vmul.f32 %v69, %v43
    %v72 = vadd.f32 %v66, %v70
    %v73 = vadd.f32 %v67, %v71
    %s74 = sld [smem:[#allocation2 + $0x4]]
    %v75 = vstv %s74
    %v76 = vmul.f32 %v75, %v45
    %v77 = vmul.f32 %v75, %v47
    %v78 = vadd.f32 %v72, %v76
    %v79 = vadd.f32 %v73, %v77
    %s80 = sld [smem:[#allocation2 + $0x5]]
    %v81 = vstv %s80
    %v82 = vmul.f32 %v81, %v49
    %v83 = vmul.f32 %v81, %v51
    %v84 = vadd.f32 %v78, %v82
    %v85 = vadd.f32 %v79, %v83
    %88 = vst [vmem:[#allocation1] ss:$2 sm:$0xff] %v84
    %s89 = scalar_lea.vmem [#allocation1], 1
    %90 = vst [vmem:[%s89] ss:$2 sm:$0xff] %v85
    %v91 = vld [vmem:[#allocation1] sm:$0xff]
    %93 = vst [vmem:[#allocation5] sm:$0xf] %v91
    %s94 = sld [smem:[#allocation2 + $0x80]]
    %v95 = vstv %s94
    %v96 = vmul.f32 %v95, %v29
    %v97 = vmul.f32 %v95, %v31
    %s98 = sld [smem:[#allocation2 + $0x81]]
    %v99 = vstv %s98
    %v100 = vmul.f32 %v99, %v33
    %v101 = vmul.f32 %v99, %v35
    %v102 = vadd.f32 %v96, %v100
    %v103 = vadd.f32 %v97, %v101
    %s104 = sld [smem:[#allocation2 + $0x82]]
    %v105 = vstv %s104
    %v106 = vmul.f32 %v105, %v37
    %v107 = vmul.f32 %v105, %v39
    %v108 = vadd.f32 %v102, %v106
    %v109 = vadd.f32 %v103, %v107
    %s110 = sld [smem:[#allocation2 + $0x83]]
    %v111 = vstv %s110
    %v112 = vmul.f32 %v111, %v41
    %v113 = vmul.f32 %v111, %v43
    %v114 = vadd.f32 %v108, %v112
    %v115 = vadd.f32 %v109, %v113
    %s116 = sld [smem:[#allocation2 + $0x84]]
    %v117 = vstv %s116
    %v118 = vmul.f32 %v117, %v45
    %v119 = vmul.f32 %v117, %v47
    %v120 = vadd.f32 %v114, %v118
    %v121 = vadd.f32 %v115, %v119
    %s122 = sld [smem:[#allocation2 + $0x85]]
    %v123 = vstv %s122
    %v124 = vmul.f32 %v123, %v49
    %v125 = vmul.f32 %v123, %v51
    %v126 = vadd.f32 %v120, %v124
    %v127 = vadd.f32 %v121, %v125
    %v128 = vlaneseq
    %v129 = vand.u32 %v128, 127
    %v130 = vlaneseq
    %v131 = vshrl.u32 %v130, 7
    %v132 = vmul.u32 %v131, 2
    %vm133 = vcmp.eq.s32.totalorder %v129, %v132
    %v134 = vsel %vm133, 1, 0
    %vm135 = vcmp.eq.s32.totalorder %v134, 1
    %v138 = vperm.slane %v126, 0
    %v139 = vperm.slane %v127, 0
    %v142 = vsel %vm135, %v138, 0.0
    %v143 = vsel %vm135, %v139, 0.0
    %vm144 = vcmask 130048
    %v145 = vsel %vm144, %v142, 0.0
    %146 = vadd.xlane.f32.xlu0 %v145
    %v147 = vpop.xlane.xlu0 %146
    %v148 = vsel %vm144, %v143, 0.0
    %149 = vadd.xlane.f32.xlu0 %v148
    %v150 = vpop.xlane.xlu0 %149
    %v153 = vperm.slane %v147, %v129
    %v154 = vperm.slane %v150, %v129
    %vm155 = vcmask 1041409
    %v156 = vsel %vm155, %v154, %v153
    %vm158 = vcmask 58368
    %159 = vst.msk [vmem:[#allocation6] sm:$0x3] %vm158, %v156
    %160 = vrot.lane.b32.xlu0 %v138, 96
    %v161 = vpop.permute.xlu0 %160
    %162 = vrot.lane.b32.xlu0 %v139, 96
    %v163 = vpop.permute.xlu0 %162
    %v166 = vsel %vm135, %v161, 0.0
    %v167 = vsel %vm135, %v163, 0.0
    %v168 = vsel %vm144, %v166, 0.0
    %169 = vadd.xlane.f32.xlu0 %v168
    %v170 = vpop.xlane.xlu0 %169
    %v171 = vsel %vm144, %v167, 0.0
    %172 = vadd.xlane.f32.xlu0 %v171
    %v173 = vpop.xlane.xlu0 %172
    %v176 = vadd.s32 %v129, 4294967288
    %v177 = vperm.slane %v170, %v176
    %v178 = vperm.slane %v173, %v176
    %v179 = vsel %vm155, %v178, %v177
    %vm181 = vcmask 123968
    %182 = vst.msk [vmem:[#allocation6] sm:$0x3] %vm181, %v179
    %183 = vrot.lane.b32.xlu0 %v138, 64
    %v184 = vpop.permute.xlu0 %183
    %185 = vrot.lane.b32.xlu0 %v139, 64
    %v186 = vpop.permute.xlu0 %185
    %v189 = vsel %vm135, %v184, 0.0
    %v190 = vsel %vm135, %v186, 0.0
    %v191 = vsel %vm144, %v189, 0.0
    %192 = vadd.xlane.f32.xlu0 %v191
    %v193 = vpop.xlane.xlu0 %192
    %v194 = vsel %vm144, %v190, 0.0
    %195 = vadd.xlane.f32.xlu0 %v194
    %v196 = vpop.xlane.xlu0 %195
    %v199 = vadd.s32 %v129, 4294967280
    %v200 = vperm.slane %v193, %v199
    %v201 = vperm.slane %v196, %v199
    %v202 = vsel %vm155, %v201, %v200
    %vm204 = vcmask 189568
    %205 = vst.msk [vmem:[#allocation6] sm:$0x3] %vm204, %v202
    %206 = vrot.lane.b32.xlu0 %v138, 32
    %v207 = vpop.permute.xlu0 %206
    %208 = vrot.lane.b32.xlu0 %v139, 32
    %v209 = vpop.permute.xlu0 %208
    %v212 = vsel %vm135, %v207, 0.0
    %v213 = vsel %vm135, %v209, 0.0
    %v214 = vsel %vm144, %v212, 0.0
    %215 = vadd.xlane.f32.xlu0 %v214
    %v216 = vpop.xlane.xlu0 %215
    %v217 = vsel %vm144, %v213, 0.0
    %218 = vadd.xlane.f32.xlu0 %v217
    %v219 = vpop.xlane.xlu0 %218
    %v222 = vadd.s32 %v129, 4294967272
    %v223 = vperm.slane %v216, %v222
    %v224 = vperm.slane %v219, %v222
    %v225 = vsel %vm155, %v224, %v223
    %vm227 = vcmask 255168
    %228 = vst.msk [vmem:[#allocation6] sm:$0x3] %vm227, %v225
    %v229 = vrot.slane %v126, 1
    %v230 = vrot.slane %v127, 1
    %v231 = vperm.slane %v229, 0
    %v232 = vperm.slane %v230, 0
    %v235 = vsel %vm135, %v231, 0.0
    %v236 = vsel %vm135, %v232, 0.0
    %v237 = vsel %vm144, %v235, 0.0
    %238 = vadd.xlane.f32.xlu0 %v237
    %v239 = vpop.xlane.xlu0 %238
    %v240 = vsel %vm144, %v236, 0.0
    %241 = vadd.xlane.f32.xlu0 %v240
    %v242 = vpop.xlane.xlu0 %241
    %v245 = vadd.s32 %v129, 4294967264
    %v246 = vperm.slane %v239, %v245
    %v247 = vperm.slane %v242, %v245
    %v248 = vsel %vm155, %v247, %v246
    %vm250 = vcmask 320768
    %251 = vst.msk [vmem:[#allocation6] sm:$0x3] %vm250, %v248
    %252 = vrot.lane.b32.xlu0 %v126, 96
    %v253 = vpop.permute.xlu0 %252
    %254 = vrot.lane.b32.xlu0 %v127, 96
    %v255 = vpop.permute.xlu0 %254
    %v256 = vrot.slane %v253, 1
    %v257 = vrot.slane %v255, 1
    %v258 = vperm.slane %v256, 0
    %v259 = vperm.slane %v257, 0
    %v262 = vsel %vm135, %v258, 0.0
    %v263 = vsel %vm135, %v259, 0.0
    %v264 = vsel %vm144, %v262, 0.0
    %265 = vadd.xlane.f32.xlu0 %v264
    %v266 = vpop.xlane.xlu0 %265
    %v267 = vsel %vm144, %v263, 0.0
    %268 = vadd.xlane.f32.xlu0 %v267
    %v269 = vpop.xlane.xlu0 %268
    %v272 = vadd.s32 %v129, 4294967256
    %v273 = vperm.slane %v266, %v272
    %v274 = vperm.slane %v269, %v272
    %v275 = vsel %vm155, %v274, %v273
    %vm277 = vcmask 386368
    %278 = vst.msk [vmem:[#allocation6] sm:$0x3] %vm277, %v275
    %279 = vrot.lane.b32.xlu0 %v126, 64
    %v280 = vpop.permute.xlu0 %279
    %281 = vrot.lane.b32.xlu0 %v127, 64
    %v282 = vpop.permute.xlu0 %281
    %v283 = vrot.slane %v280, 1
    %v284 = vrot.slane %v282, 1
    %v285 = vperm.slane %v283, 0
    %v286 = vperm.slane %v284, 0
    %v289 = vsel %vm135, %v285, 0.0
    %v290 = vsel %vm135, %v286, 0.0
    %v291 = vsel %vm144, %v289, 0.0
    %292 = vadd.xlane.f32.xlu0 %v291
    %v293 = vpop.xlane.xlu0 %292
    %v294 = vsel %vm144, %v290, 0.0
    %295 = vadd.xlane.f32.xlu0 %v294
    %v296 = vpop.xlane.xlu0 %295
    %v299 = vadd.s32 %v129, 4294967248
    %v300 = vperm.slane %v293, %v299
    %v301 = vperm.slane %v296, %v299
    %v302 = vsel %vm155, %v301, %v300
    %vm304 = vcmask 451968
    %305 = vst.msk [vmem:[#allocation6] sm:$0x3] %vm304, %v302
    %306 = vrot.lane.b32.xlu0 %v126, 32
    %v307 = vpop.permute.xlu0 %306
    %308 = vrot.lane.b32.xlu0 %v127, 32
    %v309 = vpop.permute.xlu0 %308
    %v310 = vrot.slane %v307, 1
    %v311 = vrot.slane %v309, 1
    %v312 = vperm.slane %v310, 0
    %v313 = vperm.slane %v311, 0
    %v316 = vsel %vm135, %v312, 0.0
    %v317 = vsel %vm135, %v313, 0.0
    %v318 = vsel %vm144, %v316, 0.0
    %319 = vadd.xlane.f32.xlu0 %v318
    %v320 = vpop.xlane.xlu0 %319
    %v321 = vsel %vm144, %v317, 0.0
    %322 = vadd.xlane.f32.xlu0 %v321
    %v323 = vpop.xlane.xlu0 %322
    %v326 = vadd.s32 %v129, 4294967240
    %v327 = vperm.slane %v320, %v326
    %v328 = vperm.slane %v323, %v326
    %v329 = vsel %vm155, %v328, %v327
    %vm331 = vcmask 517568
    %332 = vst.msk [vmem:[#allocation6] sm:$0x3] %vm331, %v329
    %s333 = sld [smem:[#allocation2 + $0x100]]
    %v334 = vstv %s333
    %v335 = vmul.f32 %v334, %v29
    %v336 = vmul.f32 %v334, %v31
    %s337 = sld [smem:[#allocation2 + $0x101]]
    %v338 = vstv %s337
    %v339 = vmul.f32 %v338, %v33
    %v340 = vmul.f32 %v338, %v35
    %v341 = vadd.f32 %v335, %v339
    %v342 = vadd.f32 %v336, %v340
    %s343 = sld [smem:[#allocation2 + $0x102]]
    %v344 = vstv %s343
    %v345 = vmul.f32 %v344, %v37
    %v346 = vmul.f32 %v344, %v39
    %v347 = vadd.f32 %v341, %v345
    %v348 = vadd.f32 %v342, %v346
    %s349 = sld [smem:[#allocation2 + $0x103]]
    %v350 = vstv %s349
    %v351 = vmul.f32 %v350, %v41
    %v352 = vmul.f32 %v350, %v43
    %v353 = vadd.f32 %v347, %v351
    %v354 = vadd.f32 %v348, %v352
    %s355 = sld [smem:[#allocation2 + $0x104]]
    %v356 = vstv %s355
    %v357 = vmul.f32 %v356, %v45
    %v358 = vmul.f32 %v356, %v47
    %v359 = vadd.f32 %v353, %v357
    %v360 = vadd.f32 %v354, %v358
    %s361 = sld [smem:[#allocation2 + $0x105]]
    %v362 = vstv %s361
    %v363 = vmul.f32 %v362, %v49
    %v364 = vmul.f32 %v362, %v51
    %v365 = vadd.f32 %v359, %v363
    %v366 = vadd.f32 %v360, %v364
    %v367 = vmul.u32 %v131, 4
    %vm368 = vcmp.eq.s32.totalorder %v129, %v367
    %v369 = vsel %vm368, 1, 0
    %vm370 = vcmp.eq.s32.totalorder %v369, 1
    %v373 = vperm.slane %v365, 0
    %v374 = vperm.slane %v366, 0
    %v377 = vsel %vm370, %v373, 0.0
    %v378 = vsel %vm370, %v374, 0.0
    %vm379 = vcmask 125952
    %v380 = vsel %vm379, %v377, 0.0
    %381 = vadd.xlane.f32.xlu0 %v380
    %v382 = vpop.xlane.xlu0 %381
    %v383 = vsel %vm379, %v378, 0.0
    %384 = vadd.xlane.f32.xlu0 %v383
    %v385 = vpop.xlane.xlu0 %384
    %v388 = vperm.slane %v382, %v129
    %v389 = vperm.slane %v385, %v129
    %v390 = vsel %vm155, %v389, %v388
    %vm392 = vcmask 25600
    %393 = vst.msk [vmem:[#allocation8] sm:$0x3] %vm392, %v390
    %394 = vrot.lane.b32.xlu0 %v373, 64
    %v395 = vpop.permute.xlu0 %394
    %396 = vrot.lane.b32.xlu0 %v374, 64
    %v397 = vpop.permute.xlu0 %396
    %v400 = vsel %vm370, %v395, 0.0
    %v401 = vsel %vm370, %v397, 0.0
    %v402 = vsel %vm379, %v400, 0.0
    %403 = vadd.xlane.f32.xlu0 %v402
    %v404 = vpop.xlane.xlu0 %403
    %v405 = vsel %vm379, %v401, 0.0
    %406 = vadd.xlane.f32.xlu0 %v405
    %v407 = vpop.xlane.xlu0 %406
    %v410 = vadd.s32 %v129, 4294967292
    %v411 = vperm.slane %v404, %v410
    %v412 = vperm.slane %v407, %v410
    %v413 = vsel %vm155, %v412, %v411
    %vm415 = vcmask 58400
    %416 = vst.msk [vmem:[#allocation8] sm:$0x3] %vm415, %v413
    %v417 = vrot.slane %v365, 1
    %v418 = vrot.slane %v366, 1
    %v419 = vperm.slane %v417, 0
    %v420 = vperm.slane %v418, 0
    %v423 = vsel %vm370, %v419, 0.0
    %v424 = vsel %vm370, %v420, 0.0
    %v425 = vsel %vm379, %v423, 0.0
    %426 = vadd.xlane.f32.xlu0 %v425
    %v427 = vpop.xlane.xlu0 %426
    %v428 = vsel %vm379, %v424, 0.0
    %429 = vadd.xlane.f32.xlu0 %v428
    %v430 = vpop.xlane.xlu0 %429
    %v433 = vperm.slane %v427, %v176
    %v434 = vperm.slane %v430, %v176
    %v435 = vsel %vm155, %v434, %v433
    %vm437 = vcmask 91200
    %438 = vst.msk [vmem:[#allocation8] sm:$0x3] %vm437, %v435
    %439 = vrot.lane.b32.xlu0 %v365, 64
    %v440 = vpop.permute.xlu0 %439
    %441 = vrot.lane.b32.xlu0 %v366, 64
    %v442 = vpop.permute.xlu0 %441
    %v443 = vrot.slane %v440, 1
    %v444 = vrot.slane %v442, 1
    %v445 = vperm.slane %v443, 0
    %v446 = vperm.slane %v444, 0
    %v449 = vsel %vm370, %v445, 0.0
    %v450 = vsel %vm370, %v446, 0.0
    %v451 = vsel %vm379, %v449, 0.0
    %452 = vadd.xlane.f32.xlu0 %v451
    %v453 = vpop.xlane.xlu0 %452
    %v454 = vsel %vm379, %v450, 0.0
    %455 = vadd.xlane.f32.xlu0 %v454
    %v456 = vpop.xlane.xlu0 %455
    %v459 = vadd.s32 %v129, 4294967284
    %v460 = vperm.slane %v453, %v459
    %v461 = vperm.slane %v456, %v459
    %v462 = vsel %vm155, %v461, %v460
    %vm464 = vcmask 124000
    %465 = vst.msk [vmem:[#allocation8] sm:$0x3] %vm464, %v462
    // Predicated region
    $region14: #{tpu_custom_call.1} parent=1 // pred_check
      _
    $region15: #{tpu_custom_call.1} parent=1 // pred_check_branch
      %467 = sbr.rel (0) target = $region17
    $region16: #{tpu_custom_call.1} parent=1 // pred_region
      %469 = vsyncadd [#allocation3], 0
      %s471 = sshll.u32 [#allocation5], 4
      %s472 = int_to_ptr.vmem [resolvable:$true] %s471
      %s473 = sshll.u32 %s2, 4
      %s474 = int_to_ptr.hbm [resolvable:$true] %s473
      %476 = dma.vmem_to_hbm [thread:$0]  %s472, 64, %s474, [#allocation3]
    $region17: #{tpu_custom_call.1} parent=1 // pred_fallthru
      _
    // Predicated region
    $region18: #{tpu_custom_call.1} parent=1 // pred_check
      _
    $region19: #{tpu_custom_call.1} parent=1 // pred_check_branch
      %478 = sbr.rel (0) target = $region21
    $region20: #{tpu_custom_call.1} parent=1 // pred_region
      %480 = vsyncadd [#allocation7], 0
      %s482 = sshll.u32 [#allocation6], 4
      %s483 = int_to_ptr.vmem [resolvable:$true] %s482
      %s484 = sshll.u32 %s3, 4
      %s485 = int_to_ptr.hbm [resolvable:$true] %s484
      %487 = dma.vmem_to_hbm [thread:$0]  %s483, 32, %s485, [#allocation7]
    $region21: #{tpu_custom_call.1} parent=1 // pred_fallthru
      _
    // Predicated region
    $region22: #{tpu_custom_call.1} parent=1 // pred_check
      _
    $region23: #{tpu_custom_call.1} parent=1 // pred_check_branch
      %489 = sbr.rel (0) target = $region25
    $region24: #{tpu_custom_call.1} parent=1 // pred_region
      %491 = vsyncadd [#allocation7], 0
      %s493 = sshll.u32 [#allocation8], 4
      %s494 = int_to_ptr.vmem [resolvable:$true] %s493
      %s495 = sshll.u32 %s4, 4
      %s496 = int_to_ptr.hbm [resolvable:$true] %s495
      %498 = dma.vmem_to_hbm [thread:$0]  %s494, 32, %s496, [#allocation7]
    $region25: #{tpu_custom_call.1} parent=1 // pred_fallthru
      _
    // Predicated region
    $region26: #{tpu_custom_call.1} parent=1 // pred_check
      _
    $region27: #{tpu_custom_call.1} parent=1 // pred_check_branch
      %500 = sbr.rel (0) target = $region29
    $region28: #{tpu_custom_call.1} parent=1 // pred_region
      %502 = dma.done [#allocation3], 64
    $region29: #{tpu_custom_call.1} parent=1 // pred_fallthru
      _
    // Predicated region
    $region30: #{tpu_custom_call.1} parent=1 // pred_check
      _
    $region31: #{tpu_custom_call.1} parent=1 // pred_check_branch
      %504 = sbr.rel (0) target = $region33
    $region32: #{tpu_custom_call.1} parent=1 // pred_region
      %506 = dma.done [#allocation7], 32
    $region33: #{tpu_custom_call.1} parent=1 // pred_fallthru
      _
    // Predicated region
    $region34: #{tpu_custom_call.1} parent=1 // pred_check
      _
    $region35: #{tpu_custom_call.1} parent=1 // pred_check_branch
      %508 = sbr.rel (0) target = $region37
    $region36: #{tpu_custom_call.1} parent=1 // pred_region
      %510 = dma.done [#allocation7], 32
    $region37: #{tpu_custom_call.1} parent=1 // pred_fallthru
      _
    %511 = vsyncpa [#allocation3], 1
    %512 = vsyncpa [#allocation7], 1
    %513 = vsyncpa [#allocation4], 1

</llo_original>
